<compile_context>
chip_gen: v7x
topology: tpu7x:2x2x1
jax: 0.10.0
libtpu: 0.0.40
codegen_flags: <defaults>
</compile_context>

<pallas_src>
import functools

import jax
import jax.numpy as jnp
from jax.experimental import pallas as pl
from jax.experimental.pallas import tpu as pltpu


# ----------------------------- kernels --------------------------------------


def _ln_affine_kernel(x_ref, g_ref, b_ref, o_ref, *, eps, inv_c):
    # x_ref/o_ref: (tile_b, C, tile_s) -- C on sublanes, spatial on lanes.
    # g_ref/b_ref: (C, tile_s) float32, lane-replicated.
    x = x_ref[...].astype(jnp.float32)
    mean = jnp.sum(x, axis=1, keepdims=True) * inv_c       # (tile_b, 1, tile_s)
    xc = x - mean
    var = jnp.sum(xc * xc, axis=1, keepdims=True) * inv_c  # two-pass: no cancellation
    y = xc * jax.lax.rsqrt(var + eps)
    o_ref[...] = (y * g_ref[...] + b_ref[...]).astype(o_ref.dtype)


def _ln_plain_kernel(x_ref, o_ref, *, eps, inv_c):
    x = x_ref[...].astype(jnp.float32)
    mean = jnp.sum(x, axis=1, keepdims=True) * inv_c
    xc = x - mean
    var = jnp.sum(xc * xc, axis=1, keepdims=True) * inv_c
    o_ref[...] = (xc * jax.lax.rsqrt(var + eps)).astype(o_ref.dtype)


# --------------------------- tiling / budgets --------------------------------

_SUBLANES_PER_TILE = {4: 8, 2: 16, 1: 32}  # itemsize -> sublane tile


def _cdiv(a, b):
    return -(-a // b)


def _scoped_vmem_limit_bytes():
    """Generation-aware scoped-VMEM budget."""
    cap = None
    try:
        info = pltpu.get_tpu_info()
        cap = getattr(info, "vmem_capacity_bytes", None)
    except Exception:
        cap = None
    if cap is None:
        cap = 64 * 1024 * 1024  # unknown: assume the tightest (v7x-like) chip
    if cap <= 64 * 1024 * 1024:
        return 32 * 1024 * 1024  # v7x: 64 MiB physical per TC -> 32 MiB scoped
    return 64 * 1024 * 1024      # v5e/v6e: 128 MiB physical -> roomy 64 MiB scoped


def _pick_tile_s(s, budget):
    """Lane tile: full extent if it fits, else a multiple of 128, preferring an
    exact divisor of S (avoids masked boundary stores)."""
    if s <= budget:
        return s
    target = max(128, (budget // 128) * 128)
    lo = max(128, (target * 3) // 4)  # accept a divisor within ~25% of target
    t = target
    while t >= lo:
        if s % t == 0:
            return t
        t -= 128
    return target


def _tile_plan(b, c, s, dtype):
    """Choose (tile_b, tile_s, vmem_limit) with honest VMEM accounting."""
    itemsize = jnp.dtype(dtype).itemsize
    sublane = _SUBLANES_PER_TILE.get(itemsize, 8)
    c_pad = max(sublane, _cdiv(c, sublane) * sublane)  # sublane-padded channel count

    vmem_limit = _scoped_vmem_limit_bytes()
    # Per padded block element: 2x double-buffered input + 2x double-buffered
    # output (I/O dtype) plus ~3 live f32 temporaries inside the body.
    per_elem_bytes = 4 * itemsize + 3 * 4
    budget_elems = (vmem_limit * 6 // 10) // per_elem_bytes  # ~60% of the scoped limit

    lane_budget = max(128, budget_elems // c_pad)  # budget for tile_b * tile_s
    tile_s = _pick_tile_s(s, lane_budget)
    tile_b = max(1, min(b, lane_budget // max(tile_s, 1)))

    # v7x has 2 TensorCores: make sure the 'parallel' grid has >= 2 steps.
    if _cdiv(b, tile_b) * _cdiv(s, tile_s) < 2:
        if b >= 2:
            tile_b = _cdiv(b, 2)
        elif s >= 256:
            tile_s = _pick_tile_s(s, s // 2)
        # else: input is tiny; a single step is fine.
    return tile_b, tile_s, vmem_limit


# ------------------------------ pallas wrapper -------------------------------


def _layernorm_ncs(x3d, gamma, beta, eps, elementwise_affine):
    """LayerNorm over axis 1 (C) of a (B, C, S) array via Pallas."""
    b, c, s = x3d.shape
    tile_b, tile_s, vmem_limit = _tile_plan(b, c, s, x3d.dtype)
    grid = (pl.cdiv(b, tile_b), pl.cdiv(s, tile_s))

    x_spec = pl.BlockSpec((tile_b, c, tile_s), lambda bi, si: (bi, 0, si))
    o_spec = pl.BlockSpec((tile_b, c, tile_s), lambda bi, si: (bi, 0, si))
    compiler_params = pltpu.CompilerParams(
        dimension_semantics=("parallel", "parallel"),
        vmem_limit_bytes=vmem_limit,
    )
    out_shape = jax.ShapeDtypeStruct((b, c, s), x3d.dtype)

    if elementwise_affine:
        # Lane-replicated affine params: plain vreg-aligned VPU mul/add in-kernel.
        g_rep = jnp.broadcast_to(gamma.reshape(c, 1).astype(jnp.float32), (c, tile_s))
        b_rep = jnp.broadcast_to(beta.reshape(c, 1).astype(jnp.float32), (c, tile_s))
        kernel = functools.partial(_ln_affine_kernel, eps=eps, inv_c=1.0 / c)
        return pl.pallas_call(
            kernel,
            out_shape=out_shape,
            grid_spec=pltpu.PrefetchScalarGridSpec(
                num_scalar_prefetch=0,
                grid=grid,
                in_specs=[
                    x_spec,
                    pl.BlockSpec((c, tile_s), lambda bi, si: (0, 0)),
                    pl.BlockSpec((c, tile_s), lambda bi, si: (0, 0)),
                ],
                out_specs=o_spec,
            ),
            compiler_params=compiler_params,
        )(x3d, g_rep, b_rep)

    # No affine: skip the 2 VPU ops/element and the param fetch entirely.
    kernel = functools.partial(_ln_plain_kernel, eps=eps, inv_c=1.0 / c)
    return pl.pallas_call(
        kernel,
        out_shape=out_shape,
        grid_spec=pltpu.PrefetchScalarGridSpec(
            num_scalar_prefetch=0,
            grid=grid,
            in_specs=[x_spec],
            out_specs=o_spec,
        ),
        compiler_params=compiler_params,
    )(x3d)


class LayerNormPallas:
    """Mirrors mindspeed_mm LayerNorm: channel-dim layernorm on NCHW / NCTHW.

    Defaults match PyTorch nn.LayerNorm (gamma=1, beta=0); custom affine params
    may be supplied to exercise the affine path.
    """

    def __init__(self, num_channels, eps=1e-6, elementwise_affine=True,
                 gamma=None, beta=None):
        self.num_channels = num_channels
        self.eps = float(eps)
        self.elementwise_affine = bool(elementwise_affine)
        if self.elementwise_affine:
            self.gamma = (jnp.ones((num_channels,), jnp.float32)
                          if gamma is None else jnp.asarray(gamma, jnp.float32))
            self.beta = (jnp.zeros((num_channels,), jnp.float32)
                         if beta is None else jnp.asarray(beta, jnp.float32))
        else:
            self.gamma = jnp.ones((num_channels,), jnp.float32)
            self.beta = jnp.zeros((num_channels,), jnp.float32)

    def __call__(self, x):
        if x.ndim == 5:
            b, c, t, h, w = x.shape
            s = t * h * w
        elif x.ndim == 4:
            b, c, h, w = x.shape
            s = h * w
        else:
            raise ValueError("expected 4-D (NCHW) or 5-D (NCTHW) input")
        if c != self.num_channels:
            raise ValueError("channel dim mismatch")

        # Collapse trailing spatial dims: contiguous row-major reshape, no copy.
        x3d = x.reshape(b, c, s)
        y3d = _layernorm_ncs(x3d, self.gamma, self.beta, self.eps,
                             self.elementwise_affine)
        return y3d.reshape(x.shape)


# ------------------------------- reference -----------------------------------


def _reference(x, gamma, beta, eps):
    # Pure-JAX reference matching the PyTorch module (channels-last layernorm).
    if x.ndim == 5:
        xc = jnp.transpose(x, (0, 2, 3, 4, 1))
    else:
        xc = jnp.transpose(x, (0, 2, 3, 1))
    xf = xc.astype(jnp.float32)
    mean = jnp.mean(xf, axis=-1, keepdims=True)
    var = jnp.mean((xf - mean) ** 2, axis=-1, keepdims=True)
    y = (xf - mean) * jax.lax.rsqrt(var + eps) * gamma + beta
    y = y.astype(x.dtype)
    if x.ndim == 5:
        return jnp.transpose(y, (0, 4, 1, 2, 3))
    return jnp.transpose(y, (0, 3, 1, 2))


if __name__ == "__main__":
    key = jax.random.PRNGKey(0)
    k_x4, k_x5, kg, kb = jax.random.split(key, 4)

    B, C, H, W = 2, 4, 16, 16
    x4 = jax.random.normal(k_x4, (B, C, H, W), jnp.float32)

    # Non-trivial affine params so the affine path is actually exercised
    # (defaults are PyTorch's ones/zeros).
    gamma = 1.0 + 0.1 * jax.random.normal(kg, (C,), jnp.float32)
    beta = 0.1 * jax.random.normal(kb, (C,), jnp.float32)

    ln = LayerNormPallas(num_channels=C, eps=1e-6, elementwise_affine=True,
                         gamma=gamma, beta=beta)

    y4 = jax.block_until_ready(ln(x4))
    y4_ref = _reference(x4, ln.gamma, ln.beta, ln.eps)
    assert y4.shape == x4.shape
    assert jnp.max(jnp.abs(y4 - y4_ref)) < 1e-4

    # 5-D (NCTHW) path.
    T = 3
    x5 = jax.random.normal(k_x5, (B, C, T, 8, 8), jnp.float32)
    y5 = jax.block_until_ready(ln(x5))
    y5_ref = _reference(x5, ln.gamma, ln.beta, ln.eps)
    assert y5.shape == x5.shape
    assert jnp.max(jnp.abs(y5 - y5_ref)) < 1e-4

    # elementwise_affine=False path (affine skipped entirely in-kernel).
    ln_plain = LayerNormPallas(num_channels=C, eps=1e-6, elementwise_affine=False)
    y4p = jax.block_until_ready(ln_plain(x4))
    y4p_ref = _reference(x4, ln_plain.gamma, ln_plain.beta, ln_plain.eps)
    assert jnp.max(jnp.abs(y4p - y4p_ref)) < 1e-4

    print("KERNEL_OK")
</pallas_src>

<mosaic_0001>
module attributes {stable_mosaic.version = 11 : i64} {
  func.func @_ln_affine_kernel(%arg0: i32, %arg1: i32, %arg2: memref<1x4x256xf32, #tpu.memory_space<vmem>>, %arg3: memref<4x256xf32, #tpu.memory_space<vmem>>, %arg4: memref<4x256xf32, #tpu.memory_space<vmem>>, %arg5: memref<1x4x256xf32, #tpu.memory_space<vmem>>) attributes {dimension_semantics = [#tpu.dimension_semantics<parallel>, #tpu.dimension_semantics<parallel>], iteration_bounds = array<i64: 2, 1>, scalar_prefetch = 0 : i64, scratch_operands = 0 : i64, tpu.core_type = #tpu.core_type<tc>, window_params = [{transform_indices = @transform_0, window_bounds = array<i64: 1, 4, 256>}, {pipeline_mode = #tpu.pipeline_mode<synchronous>, transform_indices = @transform_1, window_bounds = array<i64: 4, 256>}, {pipeline_mode = #tpu.pipeline_mode<synchronous>, transform_indices = @transform_2, window_bounds = array<i64: 4, 256>}, {transform_indices = @transform_3, window_bounds = array<i64: 1, 4, 256>}]} {
    %c0 = arith.constant 0 : index
    %c0_0 = arith.constant 0 : index
    %c0_1 = arith.constant 0 : index
    %0 = vector.load %arg2[%c0, %c0_0, %c0_1] : memref<1x4x256xf32, #tpu.memory_space<vmem>>, vector<1x4x256xf32>
    %cst = arith.constant dense<0.000000e+00> : vector<1x256xf32>
    %1 = vector.multi_reduction <add>, %0, %cst [1] : vector<1x4x256xf32> to vector<1x256xf32>
    %2 = vector.shape_cast %1 : vector<1x256xf32> to vector<1x1x256xf32>
    %cst_2 = arith.constant 2.500000e-01 : f32
    %3 = vector.broadcast %cst_2 : f32 to vector<1x1x256xf32>
    %4 = arith.mulf %2, %3 : vector<1x1x256xf32>
    %5 = vector.broadcast %4 : vector<1x1x256xf32> to vector<1x4x256xf32>
    %6 = arith.subf %0, %5 : vector<1x4x256xf32>
    %7 = arith.mulf %6, %6 : vector<1x4x256xf32>
    %cst_3 = arith.constant dense<0.000000e+00> : vector<1x256xf32>
    %8 = vector.multi_reduction <add>, %7, %cst_3 [1] : vector<1x4x256xf32> to vector<1x256xf32>
    %9 = vector.shape_cast %8 : vector<1x256xf32> to vector<1x1x256xf32>
    %cst_4 = arith.constant 2.500000e-01 : f32
    %10 = vector.broadcast %cst_4 : f32 to vector<1x1x256xf32>
    %11 = arith.mulf %9, %10 : vector<1x1x256xf32>
    %cst_5 = arith.constant 9.99999997E-7 : f32
    %12 = vector.broadcast %cst_5 : f32 to vector<1x1x256xf32>
    %13 = arith.addf %11, %12 : vector<1x1x256xf32>
    %14 = math.rsqrt %13 : vector<1x1x256xf32>
    %15 = vector.broadcast %14 : vector<1x1x256xf32> to vector<1x4x256xf32>
    %16 = arith.mulf %6, %15 : vector<1x4x256xf32>
    %c0_6 = arith.constant 0 : index
    %c0_7 = arith.constant 0 : index
    %17 = vector.load %arg3[%c0_6, %c0_7] : memref<4x256xf32, #tpu.memory_space<vmem>>, vector<4x256xf32>
    %18 = vector.shape_cast %17 : vector<4x256xf32> to vector<1x4x256xf32>
    %19 = arith.mulf %16, %18 : vector<1x4x256xf32>
    %c0_8 = arith.constant 0 : index
    %c0_9 = arith.constant 0 : index
    %20 = vector.load %arg4[%c0_8, %c0_9] : memref<4x256xf32, #tpu.memory_space<vmem>>, vector<4x256xf32>
    %21 = vector.shape_cast %20 : vector<4x256xf32> to vector<1x4x256xf32>
    %22 = arith.addf %19, %21 : vector<1x4x256xf32>
    %c0_10 = arith.constant 0 : index
    %c0_11 = arith.constant 0 : index
    %c0_12 = arith.constant 0 : index
    %23 = vector.load %arg5[%c0_10, %c0_11, %c0_12] : memref<1x4x256xf32, #tpu.memory_space<vmem>>, vector<1x4x256xf32>
    tpu.vector_store %arg5[%c0_10, %c0_11, %c0_12], %22 {strides = array<i32>} : memref<1x4x256xf32, #tpu.memory_space<vmem>>, vector<1x4x256xf32>,
    return
  }
  func.func @transform_0(%arg0: i32, %arg1: i32) -> (i32, i32, i32) {
    %c0_i32 = arith.constant 0 : i32
    %c0_i32_0 = arith.constant 0 : i32
    return %arg0, %c0_i32, %arg1 : i32, i32, i32
  }
  func.func @transform_1(%arg0: i32, %arg1: i32) -> (i32, i32) {
    %c0_i32 = arith.constant 0 : i32
    %c0_i32_0 = arith.constant 0 : i32
    %c0_i32_1 = arith.constant 0 : i32
    return %c0_i32, %c0_i32_0 : i32, i32
  }
  func.func @transform_2(%arg0: i32, %arg1: i32) -> (i32, i32) {
    %c0_i32 = arith.constant 0 : i32
    %c0_i32_0 = arith.constant 0 : i32
    %c0_i32_1 = arith.constant 0 : i32
    return %c0_i32, %c0_i32_0 : i32, i32
  }
  func.func @transform_3(%arg0: i32, %arg1: i32) -> (i32, i32, i32) {
    %c0_i32 = arith.constant 0 : i32
    %c0_i32_0 = arith.constant 0 : i32
    return %arg0, %c0_i32, %arg1 : i32, i32, i32
  }
}

</mosaic_0001>

<llo_original>
// kernel: tpu_custom_call.1
$region0: #{tpu_custom_call.1}
  #allocation0 [shape = 'u32[]', space=smem, size = 0x4, offset = 0x4, fixed_abs, tag = 'smem constant byte address 0x4 - core index']
  #allocation1 [shape = 'u32[144,128]{1,0:T(1,128)}', space=vmem, size = 0x12000, scoped, tag = 'internal scratch']
  %s0 = inlined_call_operand.hbm [shape: f32[2,4,256], index: 0, kind: input, shape index: {}]
  %s1 = inlined_call_operand.hbm [shape: f32[4,256], index: 1, kind: input, shape index: {}]
  %s2 = inlined_call_operand.hbm [shape: f32[4,256], index: 2, kind: input, shape index: {}]
  %s3 = inlined_call_operand.hbm [shape: f32[2,4,256], index: 3, kind: output, shape index: {}]
  %s4 = sld [smem:[#allocation0]]
  $region57: #{tpu_custom_call.1} parent=0
    _
  %s6 = ssub.s32 1, %s4
  %s7 = scalar_select 0, %s6, %s4
  $region1: #{tpu_custom_call.1} parent=0
    #allocation2 [shape = 'u8[8192]{0}', space=vmem, size = 0x2000, scoped, tag = 'input window, operand 0']
    #allocation3 [shape = 's32[2]{0}', space=sflag, size = 0x8, scoped, tag = 'scoped memory for tpu_custom_call.1']
    #allocation4 [shape = 's32[2]{0}', space=sflag, size = 0x8, scoped, tag = 'scoped memory for tpu_custom_call.1']
    #allocation5 [shape = 'u8[4096]{0}', space=vmem, size = 0x1000, scoped, tag = 'input window, operand 1, single buffered']
    #allocation6 [shape = 's32[1]{0}', space=sflag, size = 0x4, scoped, tag = 'scoped memory for tpu_custom_call.1']
    #allocation7 [shape = 'u8[4096]{0}', space=vmem, size = 0x1000, scoped, tag = 'input window, operand 2, single buffered']
    #allocation8 [shape = 'u8[8192]{0}', space=vmem, size = 0x2000, scoped, tag = 'output window, operand 0']
    %8 = vsyncpa [#allocation3], 0
    %s9 = scalar_lea.sflag [#allocation3], 1
    %10 = vsyncpa %s9, 0
    %11 = vsyncpa [#allocation6], 0
    %12 = vsyncpa [#allocation4], 0
    %s13 = scalar_lea.sflag [#allocation4], 1
    %14 = vsyncpa %s13, 0
    loop: start=0, step=1, limit=4
    $region2: #{tpu_custom_call.1} parent=1 // loop_pre_header
      _
    $region3: #{tpu_custom_call.1} parent=1 // loop_header
      %s16 = sphi 0, %s20
      %p17 = scmp.ge.s32.totalorder %s16, 4
      %s23 = sphi 0, %s35
      %s24 = sphi 0, %s31
      %s25 = sphi 0, %s23
      %s26 = sphi 0, %s24
      %s27 = sphi 0, %s25
      %s28 = sphi 0, %s26
      %s40 = sphi 0, %s42
      %s43 = sphi 0, %s40
      %s44 = sphi 0, %s43
      %s60 = sphi 0, %s44
      %s64 = sphi 0, %s64
      %s66 = sphi 0, %s64
      %s67 = sphi 0, %s66
      %s81 = sphi 0, %s67
      %s85 = sphi 0, %s85
      %s87 = sphi 0, %s85
      %s88 = sphi 0, %s87
      %s102 = sphi 0, %s88
      %s110 = sphi 0, %s112
      %s113 = sphi 0, %s110
      %s114 = sphi 0, %s113
      %s130 = sphi 0, %s114
    $region4: #{tpu_custom_call.1} parent=1 // loop_header_branch
      %19 = sbr.rel (%p17) target = $region8
    $region5: #{tpu_custom_call.1} parent=1 // loop_body
      %s21 = ssub.s32 %s16, 1
      %s22 = ssub.s32 %s16, 2
      %s29 = sadd.s32 1, %s24
      %p30 = scmp.ge.s32.totalorder %s29, 1
      %s31 = scalar_select %p30, 0, %s29
      %s32 = sadd.s32 1, %s23
      %s33 = scalar_select %p30, %s32, %s23
      %p34 = scmp.ge.s32.totalorder %s33, 2
      %s35 = scalar_select %p34, 0, %s33
      %s36 = ssub.s32 %s23, %s35
      %s37 = ssub.s32 %s24, %s31
      %s38 = sor.u32 %s36, %s37
      %p39 = scmp.eq.s32.totalorder %s38, 0
      %s41 = sadd.s32 %s40, 1
      %s42 = scalar_select %p39, %s40, %s41
      %p45 = pneg %p39
      %p46 = scmp.eq.s32.totalorder %s16, 1
      %p47 = por %p45, %p46
      %p48 = scmp.ne.s32.totalorder %s40, %s43
      %p49 = scmp.eq.s32.totalorder %s16, 0
      %p50 = por %p48, %p49
      %p51 = scmp.ne.s32.totalorder %s40, %s43
      %p52 = scmp.eq.s32.totalorder %s21, 1
      %p53 = por %p51, %p52
      %p54 = scmp.ne.s32.totalorder %s43, %s44
      %p55 = scmp.eq.s32.totalorder %s21, 0
      %p56 = por %p54, %p55
      %p57 = scmp.ne.s32.totalorder %s43, %s44
      %p58 = scmp.eq.s32.totalorder %s22, 1
      %p59 = por %p57, %p58
      %p61 = scmp.ne.s32.totalorder %s44, %s60
      %p62 = scmp.eq.s32.totalorder %s22, 0
      %p63 = por %p61, %p62
      %s65 = sadd.s32 %s64, 1
      %p68 = scmp.eq.s32.totalorder %s16, 1
      %p69 = scmp.ne.s32.totalorder %s64, %s66
      %p70 = scmp.eq.s32.totalorder %s16, 0
      %p71 = por %p69, %p70
      %p72 = scmp.ne.s32.totalorder %s64, %s66
      %p73 = scmp.eq.s32.totalorder %s21, 1
      %p74 = por %p72, %p73
      %p75 = scmp.ne.s32.totalorder %s66, %s67
      %p76 = scmp.eq.s32.totalorder %s21, 0
      %p77 = por %p75, %p76
      %p78 = scmp.ne.s32.totalorder %s66, %s67
      %p79 = scmp.eq.s32.totalorder %s22, 1
      %p80 = por %p78, %p79
      %p82 = scmp.ne.s32.totalorder %s67, %s81
      %p83 = scmp.eq.s32.totalorder %s22, 0
      %p84 = por %p82, %p83
      %s86 = sadd.s32 %s85, 1
      %p89 = scmp.eq.s32.totalorder %s16, 1
      %p90 = scmp.ne.s32.totalorder %s85, %s87
      %p91 = scmp.eq.s32.totalorder %s16, 0
      %p92 = por %p90, %p91
      %p93 = scmp.ne.s32.totalorder %s85, %s87
      %p94 = scmp.eq.s32.totalorder %s21, 1
      %p95 = por %p93, %p94
      %p96 = scmp.ne.s32.totalorder %s87, %s88
      %p97 = scmp.eq.s32.totalorder %s21, 0
      %p98 = por %p96, %p97
      %p99 = scmp.ne.s32.totalorder %s87, %s88
      %p100 = scmp.eq.s32.totalorder %s22, 1
      %p101 = por %p99, %p100
      %p103 = scmp.ne.s32.totalorder %s88, %s102
      %p104 = scmp.eq.s32.totalorder %s22, 0
      %p105 = por %p103, %p104
      %s106 = ssub.s32 %s23, %s35
      %s107 = ssub.s32 %s24, %s31
      %s108 = sor.u32 %s106, %s107
      %p109 = scmp.eq.s32.totalorder %s108, 0
      %s111 = sadd.s32 %s110, 1
      %s112 = scalar_select %p109, %s110, %s111
      %p115 = pneg %p109
      %p116 = scmp.eq.s32.totalorder %s16, 1
      %p117 = por %p115, %p116
      %p118 = scmp.ne.s32.totalorder %s110, %s113
      %p119 = scmp.eq.s32.totalorder %s16, 0
      %p120 = por %p118, %p119
      %p121 = scmp.ne.s32.totalorder %s110, %s113
      %p122 = scmp.eq.s32.totalorder %s21, 1
      %p123 = por %p121, %p122
      %p124 = scmp.ne.s32.totalorder %s113, %s114
      %p125 = scmp.eq.s32.totalorder %s21, 0
      %p126 = por %p124, %p125
      %p127 = scmp.ne.s32.totalorder %s113, %s114
      %p128 = scmp.eq.s32.totalorder %s22, 1
      %p129 = por %p127, %p128
      %p131 = scmp.ne.s32.totalorder %s114, %s130
      %p132 = scmp.eq.s32.totalorder %s22, 0
      %p133 = por %p131, %p132
      %p134 = scmp.le.s32.totalorder 1, %s16
      %p135 = scmp.lt.s32.totalorder %s16, 3
      %p136 = pnand %p134, %p135
      %p137 = pneg %p136
      // Predicated region
      $region9: #{tpu_custom_call.1} parent=5 // pred_check
        _
      $region10: #{tpu_custom_call.1} parent=5 // pred_check_branch
        %139 = sbr.rel (%p136) target = $region12
      $region11: #{tpu_custom_call.1} parent=5 // pred_region
        %s140 = ssub.s32 %s16, 1
        // Predicated region
        $region13: #{tpu_custom_call.1} parent=11 // pred_check
          %p141 = pneg %p77
        $region14: #{tpu_custom_call.1} parent=11 // pred_check_branch
          %143 = sbr.rel (%p141) target = $region16
        $region15: #{tpu_custom_call.1} parent=11 // pred_region
          %s145 = ssub.s32 128, 128
          %146 = vsyncadd [#allocation6], %s145
          %s148 = sshll.u32 [#allocation5], 4
          %s149 = int_to_ptr.vmem [resolvable:$true] %s148
          %151 = dma.hbm_to_vmem [thread:$0]  %s1, 128, %s149, [#allocation6]
        $region16: #{tpu_custom_call.1} parent=11 // pred_fallthru
          _
        // Predicated region
        $region17: #{tpu_custom_call.1} parent=11 // pred_check
          %p152 = pneg %p98
        $region18: #{tpu_custom_call.1} parent=11 // pred_check_branch
          %154 = sbr.rel (%p152) target = $region20
        $region19: #{tpu_custom_call.1} parent=11 // pred_region
          %s156 = ssub.s32 128, 128
          %157 = vsyncadd [#allocation6], %s156
          %s159 = sshll.u32 [#allocation7], 4
          %s160 = int_to_ptr.vmem [resolvable:$true] %s159
          %162 = dma.hbm_to_vmem [thread:$0]  %s2, 128, %s160, [#allocation6]
        $region20: #{tpu_custom_call.1} parent=11 // pred_fallthru
          _
      $region12: #{tpu_custom_call.1} parent=5 // pred_fallthru
        _
      %p163 = scmp.lt.s32.totalorder %s16, 2
      // Predicated region
      $region21: #{tpu_custom_call.1} parent=5 // pred_check
        %p164 = pneg %p163
      $region22: #{tpu_custom_call.1} parent=5 // pred_check_branch
        %166 = sbr.rel (%p164) target = $region24
      $region23: #{tpu_custom_call.1} parent=5 // pred_region
        // Predicated region
        $region25: #{tpu_custom_call.1} parent=23 // pred_check
          %p167 = pneg %p50
        $region26: #{tpu_custom_call.1} parent=23 // pred_check_branch
          %169 = sbr.rel (%p167) target = $region28
        $region27: #{tpu_custom_call.1} parent=23 // pred_region
          %s170 = sand.u32 %s40, 1
          %s171 = scalar_lea.sflag [#allocation3], %s170
          %s172 = sand.u32 %s40, 1
          %s173 = smul.addr %s172, 8
          %s174 = scalar_lea.vmem [#allocation2], %s173
          %s175 = smul.u32 2, %s24
          %s177 = ssub.s32 128, 128
          %178 = vsyncadd %s171, %s177
          %s179 = smul.addr %s23, 2
          %s180 = sadd.s32 %s175, %s179
          %s181 = smul.addr %s180, 64
          %s182 = scalar_lea.hbm %s0, %s181
          %s184 = sshll.u32 %s174, 4
          %s185 = int_to_ptr.vmem [resolvable:$true] %s184
          %187 = dma.hbm_to_vmem [thread:$0]  %s182, 128, %s185, %s171
        $region28: #{tpu_custom_call.1} parent=23 // pred_fallthru
          _
      $region24: #{tpu_custom_call.1} parent=5 // pred_fallthru
        _
      %p188 = scmp.le.s32.totalorder 1, %s16
      %p189 = scmp.lt.s32.totalorder %s16, 3
      %p190 = pnand %p188, %p189
      %p191 = pneg %p190
      // Predicated region
      $region29: #{tpu_custom_call.1} parent=5 // pred_check
        _
      $region30: #{tpu_custom_call.1} parent=5 // pred_check_branch
        %193 = sbr.rel (%p190) target = $region32
      $region31: #{tpu_custom_call.1} parent=5 // pred_region
        %s194 = ssub.s32 %s16, 1
        %s195 = sand.u32 %s43, 1
        %s196 = scalar_lea.sflag [#allocation3], %s195
        %s197 = sand.u32 %s43, 1
        %s198 = smul.addr %s197, 8
        %s199 = scalar_lea.vmem [#allocation2], %s198
        // Predicated region
        $region33: #{tpu_custom_call.1} parent=31 // pred_check
          %p200 = pneg %p56
        $region34: #{tpu_custom_call.1} parent=31 // pred_check_branch
          %202 = sbr.rel (%p200) target = $region36
        $region35: #{tpu_custom_call.1} parent=31 // pred_region
          %203 = dma.done %s196, 128
        $region36: #{tpu_custom_call.1} parent=31 // pred_fallthru
          _
        // Predicated region
        $region37: #{tpu_custom_call.1} parent=31 // pred_check
          %p204 = pneg %p77
        $region38: #{tpu_custom_call.1} parent=31 // pred_check_branch
          %206 = sbr.rel (%p204) target = $region40
        $region39: #{tpu_custom_call.1} parent=31 // pred_region
          %207 = dma.done [#allocation6], 128
        $region40: #{tpu_custom_call.1} parent=31 // pred_fallthru
          _
        // Predicated region
        $region41: #{tpu_custom_call.1} parent=31 // pred_check
          %p208 = pneg %p98
        $region42: #{tpu_custom_call.1} parent=31 // pred_check_branch
          %210 = sbr.rel (%p208) target = $region44
        $region43: #{tpu_custom_call.1} parent=31 // pred_region
          %211 = dma.done [#allocation6], 128
        $region44: #{tpu_custom_call.1} parent=31 // pred_fallthru
          _
        %s212 = sand.u32 %s43, 1
        %s213 = scalar_lea.sflag [#allocation3], %s212
        %s214 = sand.u32 %s43, 1
        %s215 = smul.addr %s214, 8
        %s216 = scalar_lea.vmem [#allocation2], %s215
        %p217 = pneg %p56
        %p218 = pneg %p53
        %p219 = pneg %p77
        %p220 = pneg %p74
        %p221 = pneg %p98
        %p222 = pneg %p95
        %p223 = pneg %p126
        %p224 = pneg %p123
        %s225 = sand.u32 %s113, 1
        %s226 = scalar_lea.sflag [#allocation4], %s225
        %s227 = sand.u32 %s113, 1
        %s228 = smul.addr %s227, 8
        %s229 = scalar_lea.vmem [#allocation8], %s228
        %s230 = smul.u32 2, %s26
        %s231 = smul.u32 2, %s26
        %v232 = vld [vmem:[%s199] sm:$0xff]
        %v234 = vcombine.high %v232, %v232
        %vm236 = vcmask 1043456
        %v237 = vsel %vm236, %v232, 0.0
        %v238 = vrot.slane %v237, 4
        %v239 = vadd.f32 %v237, %v238
        %v240 = vrot.slane %v239, 2
        %v241 = vadd.f32 %v239, %v240
        %v242 = vrot.slane %v241, 1
        %v243 = vadd.f32 %v241, %v242
        %v244 = vsel %vm236, %v234, 0.0
        %v245 = vrot.slane %v244, 4
        %v246 = vadd.f32 %v244, %v245
        %v247 = vrot.slane %v246, 2
        %v248 = vadd.f32 %v246, %v247
        %v249 = vrot.slane %v248, 1
        %v250 = vadd.f32 %v248, %v249
        %v251 = vmul.f32 %v243, 0.25
        %v252 = vmul.f32 %v250, 0.25
        %v255 = vcombine.low %v251, %v252
        %v257 = vsub.f32 %v232, %v255
        %v258 = vmul.f32 %v257, %v257
        %v260 = vcombine.high %v258, %v258
        %v262 = vsel %vm236, %v258, 0.0
        %v263 = vrot.slane %v262, 4
        %v264 = vadd.f32 %v262, %v263
        %v265 = vrot.slane %v264, 2
        %v266 = vadd.f32 %v264, %v265
        %v267 = vrot.slane %v266, 1
        %v268 = vadd.f32 %v266, %v267
        %v269 = vsel %vm236, %v260, 0.0
        %v270 = vrot.slane %v269, 4
        %v271 = vadd.f32 %v269, %v270
        %v272 = vrot.slane %v271, 2
        %v273 = vadd.f32 %v271, %v272
        %v274 = vrot.slane %v273, 1
        %v275 = vadd.f32 %v273, %v274
        %v276 = vmul.f32 %v268, 0.25
        %v277 = vmul.f32 %v275, 0.25
        %v278 = vadd.f32 %v276, 1e-06
        %v279 = vadd.f32 %v277, 1e-06
        %v280 = vrsqrt.pop %v278
        %v281 = vrsqrt.pop %v279
        %v284 = vcombine.low %v280, %v281
        %v286 = vmul.f32 %v257, %v284
        %v287 = vld [vmem:[#allocation5] sm:$0xff]
        %v288 = vmul.f32 %v286, %v287
        %v289 = vld [vmem:[#allocation7] sm:$0xff]
        %v290 = vadd.f32 %v288, %v289
        %291 = vst [vmem:[%s229] sm:$0xff] %v290
        %s292 = sand.u32 %s113, 1
        %s293 = scalar_lea.sflag [#allocation4], %s292
        %s294 = sand.u32 %s113, 1
        %s295 = smul.addr %s294, 8
        %s296 = scalar_lea.vmem [#allocation8], %s295
        // Predicated region
        $region45: #{tpu_custom_call.1} parent=31 // pred_check
          %p297 = pneg %p123
        $region46: #{tpu_custom_call.1} parent=31 // pred_check_branch
          %299 = sbr.rel (%p297) target = $region48
        $region47: #{tpu_custom_call.1} parent=31 // pred_region
          %s300 = smul.u32 2, %s26
          %s302 = ssub.s32 128, 128
          %303 = vsyncadd %s293, %s302
          %s304 = smul.addr %s25, 2
          %s305 = sadd.s32 %s300, %s304
          %s306 = smul.addr %s305, 64
          %s307 = scalar_lea.hbm %s3, %s306
          %s309 = sshll.u32 %s296, 4
          %s310 = int_to_ptr.vmem [resolvable:$true] %s309
          %312 = dma.vmem_to_hbm [thread:$0]  %s310, 128, %s307, %s293
        $region48: #{tpu_custom_call.1} parent=31 // pred_fallthru
          _
      $region32: #{tpu_custom_call.1} parent=5 // pred_fallthru
        _
      %p313 = scmp.le.s32.totalorder 2, %s16
      // Predicated region
      $region49: #{tpu_custom_call.1} parent=5 // pred_check
        %p314 = pneg %p313
      $region50: #{tpu_custom_call.1} parent=5 // pred_check_branch
        %316 = sbr.rel (%p314) target = $region52
      $region51: #{tpu_custom_call.1} parent=5 // pred_region
        %s317 = ssub.s32 %s16, 2
        // Predicated region
        $region53: #{tpu_custom_call.1} parent=51 // pred_check
          %p318 = pneg %p129
        $region54: #{tpu_custom_call.1} parent=51 // pred_check_branch
          %320 = sbr.rel (%p318) target = $region56
        $region55: #{tpu_custom_call.1} parent=51 // pred_region
          %s321 = sand.u32 %s114, 1
          %s322 = scalar_lea.sflag [#allocation4], %s321
          %s323 = sand.u32 %s114, 1
          %s324 = smul.addr %s323, 8
          %s325 = scalar_lea.vmem [#allocation8], %s324
          %326 = dma.done %s322, 128
        $region56: #{tpu_custom_call.1} parent=51 // pred_fallthru
          _
      $region52: #{tpu_custom_call.1} parent=5 // pred_fallthru
        _
    $region6: #{tpu_custom_call.1} parent=1 // loop_footer
      %s20 = sadd.s32 1, %s16
    $region7: #{tpu_custom_call.1} parent=1 // loop_footer_branch
      %15 = sbr.rel target = $region3
    $region8: #{tpu_custom_call.1} parent=1 // loop_exit
      _
    %327 = vsyncpa [#allocation3], 1
    %s328 = scalar_lea.sflag [#allocation3], 1
    %329 = vsyncpa %s328, 1
    %330 = vsyncpa [#allocation6], 1
    %331 = vsyncpa [#allocation4], 1
    %s332 = scalar_lea.sflag [#allocation4], 1
    %333 = vsyncpa %s332, 1

</llo_original>
